<compile_context>
chip_gen: v7x
topology: tpu7x:2x2x1
jax: 0.10.0
libtpu: 0.0.40
codegen_flags: <defaults>
</compile_context>

<pallas_src>
import jax
import jax.numpy as jnp
from jax.experimental import pallas as pl
from jax.experimental.pallas import tpu as pltpu


LANES = 128          # lane width of a vreg
MAX_TILE_ROWS = 64   # 64 rows x 128 lanes = 8192 samples per grid step


def mlp_kernel(params_ref, x_ref, o_ref):
    # x_ref: (2, tile_rows, 128) f32  -- feature-major, batch sublane+lane dense.
    # o_ref: (tile_rows, 128) f32
    x0 = x_ref[0]            # (tile_rows, 128)
    x1 = x_ref[1]            # (tile_rows, 128)

    # 9 scalars from SMEM, packed as
    # [w1[0,0], w1[0,1], w1[1,0], w1[1,1], b1[0], b1[1], w2[0], w2[1], b2[0]]
    # where w1 = fc1.weight.T (in, out), w2 = fc2.weight.T (in, out).
    w1_00 = params_ref[0]
    w1_01 = params_ref[1]
    w1_10 = params_ref[2]
    w1_11 = params_ref[3]
    b1_0 = params_ref[4]
    b1_1 = params_ref[5]
    w2_0 = params_ref[6]
    w2_1 = params_ref[7]
    b2_0 = params_ref[8]

    # fc1 + ReLU: h_j = relu(w1[0,j]*x0 + w1[1,j]*x1 + b1[j])   (VPU FMAs)
    h0 = jnp.maximum(w1_00 * x0 + w1_10 * x1 + b1_0, 0.0)
    h1 = jnp.maximum(w1_01 * x0 + w1_11 * x1 + b1_1, 0.0)

    # fc2 + Sigmoid: y = sigmoid(w2[0]*h0 + w2[1]*h1 + b2)      (EUP exp)
    y = w2_0 * h0 + w2_1 * h1 + b2_0
    o_ref[...] = jax.nn.sigmoid(y).astype(o_ref.dtype)


def mlp_forward(x, w1, b1, w2, b2):
    """x: (B, 2) f32; w1: (2, 2) = fc1.weight.T; b1: (2,); w2: (2, 1) = fc2.weight.T; b2: (1,)."""
    B = x.shape[0]

    # Tile geometry: single tile when the padded batch fits in 64x128 lanes,
    # otherwise tile the rows axis by 64 (8192 lanes per grid step).
    rows_needed = pl.cdiv(B, LANES)
    if rows_needed <= MAX_TILE_ROWS:
        tile_rows = rows_needed
        num_tiles = 1
    else:
        tile_rows = MAX_TILE_ROWS
        num_tiles = pl.cdiv(rows_needed, MAX_TILE_ROWS)
    rows = num_tiles * tile_rows
    B_pad = rows * LANES

    # Layout plumbing: pad batch, go feature-major, make batch (rows, 128) dense.
    x_pad = jnp.pad(x, ((0, B_pad - B), (0, 0)))                  # (B_pad, 2)
    x_t = x_pad.T.reshape(2, rows, LANES)                         # (2, rows, 128)

    # Pack all 9 parameters into one SMEM scalar array.
    params = jnp.concatenate(
        [w1.reshape(-1), b1.reshape(-1), w2.reshape(-1), b2.reshape(-1)]
    ).astype(jnp.float32)                                         # (9,)

    # Only shard across TensorCores (v7x) when there is enough big-tile work.
    semantics = ("parallel",) if num_tiles >= 8 else ("arbitrary",)

    out = pl.pallas_call(
        mlp_kernel,
        out_shape=jax.ShapeDtypeStruct((rows, LANES), jnp.float32),
        grid=(num_tiles,),
        in_specs=[
            pl.BlockSpec(memory_space=pltpu.MemorySpace.SMEM),    # params (9,)
            pl.BlockSpec((2, tile_rows, LANES), lambda i: (0, i, 0)),
        ],
        out_specs=pl.BlockSpec((tile_rows, LANES), lambda i: (i, 0)),
        compiler_params=pltpu.CompilerParams(
            dimension_semantics=semantics,
        ),
    )(params, x_t)

    # Back to the PyTorch-style (B, 1) output.
    return out.reshape(-1)[:B].reshape(B, 1)


def mlp_reference(x, w1, b1, w2, b2):
    h = jnp.maximum(x @ w1 + b1, 0.0)
    return jax.nn.sigmoid(h @ w2 + b2)


if __name__ == "__main__":
    key = jax.random.PRNGKey(0)
    k_x, k_w1, k_b1, k_w2, k_b2 = jax.random.split(key, 5)

    # Small batch of 2-d inputs (XOR-style): batch=8, in_features=2.
    B = 8
    x = jax.random.normal(k_x, (B, 2), dtype=jnp.float32)

    # Deterministic parameter init (stored as (in, out) = W.T of PyTorch layout).
    w1 = jax.random.normal(k_w1, (2, 2), dtype=jnp.float32) * 0.5   # fc1.weight.T
    b1 = jax.random.normal(k_b1, (2,), dtype=jnp.float32) * 0.5     # fc1.bias
    w2 = jax.random.normal(k_w2, (2, 1), dtype=jnp.float32) * 0.5   # fc2.weight.T
    b2 = jax.random.normal(k_b2, (1,), dtype=jnp.float32) * 0.5     # fc2.bias

    out = mlp_forward(x, w1, b1, w2, b2)
    out = jax.block_until_ready(out)

    ref = mlp_reference(x, w1, b1, w2, b2)
    assert out.shape == (B, 1)
    assert jnp.allclose(out, ref, atol=1e-5, rtol=1e-5), "mismatch vs reference"

    print("KERNEL_OK")
</pallas_src>

<mosaic_0001>
module attributes {stable_mosaic.version = 11 : i64} {
  func.func @mlp_kernel(%arg0: i32, %arg1: memref<9xf32, #tpu.memory_space<smem>>, %arg2: memref<2x1x128xf32, #tpu.memory_space<vmem>>, %arg3: memref<1x128xf32, #tpu.memory_space<vmem>>) attributes {dimension_semantics = [#tpu.dimension_semantics<arbitrary>], iteration_bounds = array<i64: 1>, scalar_prefetch = 0 : i64, scratch_operands = 0 : i64, tpu.core_type = #tpu.core_type<tc>, window_params = [{transform_indices = @transform_0, window_bounds = array<i64: 9>}, {transform_indices = @transform_1, window_bounds = array<i64: 2, 1, 128>}, {transform_indices = @transform_2, window_bounds = array<i64: 1, 128>}]} {
    %c0 = arith.constant 0 : index
    %c0_0 = arith.constant 0 : index
    %c0_1 = arith.constant 0 : index
    %0 = vector.load %arg2[%c0, %c0_0, %c0_1] : memref<2x1x128xf32, #tpu.memory_space<vmem>>, vector<1x1x128xf32>
    %1 = vector.shape_cast %0 : vector<1x1x128xf32> to vector<1x128xf32>
    %c1 = arith.constant 1 : index
    %c0_2 = arith.constant 0 : index
    %c0_3 = arith.constant 0 : index
    %2 = vector.load %arg2[%c1, %c0_2, %c0_3] : memref<2x1x128xf32, #tpu.memory_space<vmem>>, vector<1x1x128xf32>
    %3 = vector.shape_cast %2 : vector<1x1x128xf32> to vector<1x128xf32>
    %c0_4 = arith.constant 0 : index
    %4 = memref.load %arg1[%c0_4] : memref<9xf32, #tpu.memory_space<smem>>
    %c1_5 = arith.constant 1 : index
    %5 = memref.load %arg1[%c1_5] : memref<9xf32, #tpu.memory_space<smem>>
    %c2 = arith.constant 2 : index
    %6 = memref.load %arg1[%c2] : memref<9xf32, #tpu.memory_space<smem>>
    %c3 = arith.constant 3 : index
    %7 = memref.load %arg1[%c3] : memref<9xf32, #tpu.memory_space<smem>>
    %c4 = arith.constant 4 : index
    %8 = memref.load %arg1[%c4] : memref<9xf32, #tpu.memory_space<smem>>
    %c5 = arith.constant 5 : index
    %9 = memref.load %arg1[%c5] : memref<9xf32, #tpu.memory_space<smem>>
    %c6 = arith.constant 6 : index
    %10 = memref.load %arg1[%c6] : memref<9xf32, #tpu.memory_space<smem>>
    %c7 = arith.constant 7 : index
    %11 = memref.load %arg1[%c7] : memref<9xf32, #tpu.memory_space<smem>>
    %c8 = arith.constant 8 : index
    %12 = memref.load %arg1[%c8] : memref<9xf32, #tpu.memory_space<smem>>
    %13 = vector.broadcast %4 : f32 to vector<1x128xf32>
    %14 = arith.mulf %13, %1 : vector<1x128xf32>
    %15 = vector.broadcast %6 : f32 to vector<1x128xf32>
    %16 = arith.mulf %15, %3 : vector<1x128xf32>
    %17 = arith.addf %14, %16 : vector<1x128xf32>
    %18 = vector.broadcast %8 : f32 to vector<1x128xf32>
    %19 = arith.addf %17, %18 : vector<1x128xf32>
    %cst = arith.constant 0.000000e+00 : f32
    %20 = vector.broadcast %cst : f32 to vector<1x128xf32>
    %21 = arith.maximumf %19, %20 : vector<1x128xf32>
    %22 = vector.broadcast %5 : f32 to vector<1x128xf32>
    %23 = arith.mulf %22, %1 : vector<1x128xf32>
    %24 = vector.broadcast %7 : f32 to vector<1x128xf32>
    %25 = arith.mulf %24, %3 : vector<1x128xf32>
    %26 = arith.addf %23, %25 : vector<1x128xf32>
    %27 = vector.broadcast %9 : f32 to vector<1x128xf32>
    %28 = arith.addf %26, %27 : vector<1x128xf32>
    %cst_6 = arith.constant 0.000000e+00 : f32
    %29 = vector.broadcast %cst_6 : f32 to vector<1x128xf32>
    %30 = arith.maximumf %28, %29 : vector<1x128xf32>
    %31 = vector.broadcast %10 : f32 to vector<1x128xf32>
    %32 = arith.mulf %31, %21 : vector<1x128xf32>
    %33 = vector.broadcast %11 : f32 to vector<1x128xf32>
    %34 = arith.mulf %33, %30 : vector<1x128xf32>
    %35 = arith.addf %32, %34 : vector<1x128xf32>
    %36 = vector.broadcast %12 : f32 to vector<1x128xf32>
    %37 = arith.addf %35, %36 : vector<1x128xf32>
    %38 = arith.negf %37 : vector<1x128xf32>
    %39 = math.exp %38 : vector<1x128xf32>
    %cst_7 = arith.constant 1.000000e+00 : f32
    %40 = vector.broadcast %cst_7 : f32 to vector<1x128xf32>
    %41 = arith.addf %40, %39 : vector<1x128xf32>
    %42 = arith.divf %40, %41 : vector<1x128xf32>
    %c0_8 = arith.constant 0 : index
    %c0_9 = arith.constant 0 : index
    %43 = vector.load %arg3[%c0_8, %c0_9] : memref<1x128xf32, #tpu.memory_space<vmem>>, vector<1x128xf32>
    tpu.vector_store %arg3[%c0_8, %c0_9], %42 {strides = array<i32>} : memref<1x128xf32, #tpu.memory_space<vmem>>, vector<1x128xf32>,
    return
  }
  func.func @transform_0(%arg0: i32) -> i32 {
    %c0_i32 = arith.constant 0 : i32
    %c0_i32_0 = arith.constant 0 : i32
    return %c0_i32 : i32
  }
  func.func @transform_1(%arg0: i32) -> (i32, i32, i32) {
    %c0_i32 = arith.constant 0 : i32
    %c0_i32_0 = arith.constant 0 : i32
    %c0_i32_1 = arith.constant 0 : i32
    return %c0_i32, %arg0, %c0_i32_0 : i32, i32, i32
  }
  func.func @transform_2(%arg0: i32) -> (i32, i32) {
    %c0_i32 = arith.constant 0 : i32
    %c0_i32_0 = arith.constant 0 : i32
    return %arg0, %c0_i32 : i32, i32
  }
}

</mosaic_0001>

<llo_original>
// kernel: tpu_custom_call.1
$region0: #{tpu_custom_call.1}
  #allocation0 [shape = 'u32[]', space=smem, size = 0x4, offset = 0x4, fixed_abs, tag = 'smem constant byte address 0x4 - core index']
  #allocation1 [shape = 'u32[144,128]{1,0:T(1,128)}', space=vmem, size = 0x12000, scoped, tag = 'internal scratch']
  %s0 = inlined_call_operand.hbm [shape: f32[9], index: 0, kind: input, shape index: {}]
  %s1 = inlined_call_operand.vmem [shape: f32[2,1,128], index: 1, kind: input, shape index: {}]
  %s2 = inlined_call_operand.hbm [shape: f32[1,128], index: 2, kind: output, shape index: {}]
  %s3 = sld [smem:[#allocation0]]
  $region22: #{tpu_custom_call.1} parent=0
    _
  %s5 = ssub.s32 1, %s3
  %s6 = scalar_select 0, %s5, %s3
  $region1: #{tpu_custom_call.1} parent=0
    #allocation2 [shape = 'u8[512]{0}', space=smem, size = 0x200, scoped, tag = 'input window, operand 0, single buffered']
    #allocation3 [shape = 's32[1]{0}', space=sflag, size = 0x4, scoped, tag = 'scoped memory for tpu_custom_call.1']
    #allocation4 [shape = 's32[1]{0}', space=sflag, size = 0x4, scoped, tag = 'scoped memory for tpu_custom_call.1']
    #allocation5 [shape = 'u8[512]{0}', space=vmem, size = 0x400, scoped, tag = 'output window, operand 0, single buffered']
    %7 = vsyncpa [#allocation4], 0
    %8 = vsyncpa [#allocation3], 0
    // Predicated region
    $region2: #{tpu_custom_call.1} parent=1 // pred_check
      _
    $region3: #{tpu_custom_call.1} parent=1 // pred_check_branch
      %10 = sbr.rel (0) target = $region5
    $region4: #{tpu_custom_call.1} parent=1 // pred_region
      %s12 = ssub.s32 16, 16
      %13 = vsyncadd [#allocation4], %s12
      %16 = dma.hbm_to_smem %s0, 16, [#allocation2], [#allocation4]
    $region5: #{tpu_custom_call.1} parent=1 // pred_fallthru
      _
    // Predicated region
    $region6: #{tpu_custom_call.1} parent=1 // pred_check
      _
    $region7: #{tpu_custom_call.1} parent=1 // pred_check_branch
      %18 = sbr.rel (0) target = $region9
    $region8: #{tpu_custom_call.1} parent=1 // pred_region
      _
    $region9: #{tpu_custom_call.1} parent=1 // pred_fallthru
      _
    // Predicated region
    $region10: #{tpu_custom_call.1} parent=1 // pred_check
      _
    $region11: #{tpu_custom_call.1} parent=1 // pred_check_branch
      %20 = sbr.rel (0) target = $region13
    $region12: #{tpu_custom_call.1} parent=1 // pred_region
      %21 = dma.done [#allocation4], 16
    $region13: #{tpu_custom_call.1} parent=1 // pred_fallthru
      _
    %22 = sfence
    %v23 = vld [vmem:[%s1] sm:$0x1]
    %s24 = scalar_lea.vmem %s1, 1
    %v25 = vld [vmem:[%s24] sm:$0x1]
    %s26 = sld [smem:[#allocation2]]
    %s27 = sld [smem:[#allocation2 + $0x1]]
    %s28 = sld [smem:[#allocation2 + $0x2]]
    %s29 = sld [smem:[#allocation2 + $0x3]]
    %s30 = sld [smem:[#allocation2 + $0x4]]
    %s31 = sld [smem:[#allocation2 + $0x5]]
    %s32 = sld [smem:[#allocation2 + $0x6]]
    %s33 = sld [smem:[#allocation2 + $0x7]]
    %s34 = sld [smem:[#allocation2 + $0x8]]
    %v35 = vstv %s26
    %v36 = vmul.f32 %v35, %v23
    %v37 = vstv %s28
    %v38 = vmul.f32 %v37, %v25
    %v39 = vadd.f32 %v36, %v38
    %v40 = vstv %s30
    %v41 = vadd.f32 %v39, %v40
    %v42 = vmax.f32 %v41, 0.0
    %v43 = vstv %s27
    %v44 = vmul.f32 %v43, %v23
    %v45 = vstv %s29
    %v46 = vmul.f32 %v45, %v25
    %v47 = vadd.f32 %v44, %v46
    %v48 = vstv %s31
    %v49 = vadd.f32 %v47, %v48
    %v50 = vmax.f32 %v49, 0.0
    %v51 = vstv %s32
    %v52 = vmul.f32 %v51, %v42
    %v53 = vstv %s33
    %v54 = vmul.f32 %v53, %v50
    %v55 = vadd.f32 %v52, %v54
    %v56 = vstv %s34
    %v57 = vadd.f32 %v55, %v56
    %v58 = vxor.u32 %v57, 2147483648
    %v59 = vmul.f32 %v58, 1.442695
    %v60 = vpow.pop %v59
    %v61 = vadd.f32 %v60, 1.0
    %v62 = vrcp.pop %v61
    %v63 = vmul.f32 1.0, %v62
    %64 = vst [vmem:[#allocation5] sm:$0x1] %v63
    // Predicated region
    $region14: #{tpu_custom_call.1} parent=1 // pred_check
      _
    $region15: #{tpu_custom_call.1} parent=1 // pred_check_branch
      %66 = sbr.rel (0) target = $region17
    $region16: #{tpu_custom_call.1} parent=1 // pred_region
      %s68 = ssub.s32 16, 16
      %69 = vsyncadd [#allocation3], %s68
      %s71 = sshll.u32 [#allocation5], 4
      %s72 = int_to_ptr.vmem [resolvable:$true] %s71
      %74 = dma.vmem_to_hbm [thread:$0]  %s72, 16, %s2, [#allocation3]
    $region17: #{tpu_custom_call.1} parent=1 // pred_fallthru
      _
    // Predicated region
    $region18: #{tpu_custom_call.1} parent=1 // pred_check
      _
    $region19: #{tpu_custom_call.1} parent=1 // pred_check_branch
      %76 = sbr.rel (0) target = $region21
    $region20: #{tpu_custom_call.1} parent=1 // pred_region
      %77 = dma.done [#allocation3], 16
    $region21: #{tpu_custom_call.1} parent=1 // pred_fallthru
      _
    %78 = vsyncpa [#allocation3], 1
    %79 = vsyncpa [#allocation4], 1

</llo_original>
